<compile_context>
chip_gen: v5e
topology: v5e:2x2
jax: 0.10.0
libtpu: 0.0.40
codegen_flags: <defaults>
</compile_context>

<pallas_src>
import functools

import jax
import jax.numpy as jnp
from jax.experimental import pallas as pl
from jax.experimental.pallas import tpu as pltpu


def _choose_tile(dim, target, mult):
    """Largest t <= target with t % mult == 0 and dim % t == 0, else full dim."""
    if dim <= target:
        return dim
    t = (target // mult) * mult
    while t >= mult:
        if dim % t == 0:
            return t
        t -= mult
    return dim


def _cap_by_bytes(target, other_dim, bytes_per_elem, budget_bytes, mult):
    """Shrink `target` so a (target, other_dim) tile stays under budget_bytes."""
    cap = budget_bytes // max(1, other_dim * bytes_per_elem)
    cap = max(mult, (cap // mult) * mult)
    return min(target, cap)


# ----------------------------------------------------------------------------
# Kernel 1: dense (hidden->hidden, K-tiled) + exact GELU + LayerNorm
# ----------------------------------------------------------------------------
def dense_gelu_ln_kernel(x_ref, w_ref, b_ref, gamma_ref, beta_ref, o_ref,
                         acc_ref, *, eps):
    k = pl.program_id(1)

    @pl.when(k == 0)
    def _():
        acc_ref[...] = jnp.zeros_like(acc_ref)

    # bf16 x bf16 -> f32 accumulation on the MXU.
    acc_ref[...] += jnp.dot(
        x_ref[...].astype(jnp.bfloat16), w_ref[...],
        preferred_element_type=jnp.float32)

    @pl.when(k == pl.num_programs(1) - 1)
    def _():
        h = acc_ref[...] + b_ref[...]
        # exact (erf-based) GELU, matching torch.nn.functional.gelu default.
        h = 0.5 * h * (1.0 + jax.lax.erf(h * 0.7071067811865476))
        # LayerNorm over the FULL hidden axis (biased variance), all in f32.
        mu = jnp.mean(h, axis=-1, keepdims=True)
        var = jnp.mean((h - mu) * (h - mu), axis=-1, keepdims=True)
        h = (h - mu) * jax.lax.rsqrt(var + eps)
        h = h * gamma_ref[...] + beta_ref[...]
        o_ref[...] = h.astype(o_ref.dtype)


# ----------------------------------------------------------------------------
# Kernel 2: decoder matmul (hidden -> vocab), grid = (vocab tiles, row tiles)
# ----------------------------------------------------------------------------
def decoder_kernel(h_ref, w_ref, b_ref, o_ref):
    out = jnp.dot(h_ref[...], w_ref[...], preferred_element_type=jnp.float32)
    o_ref[...] = (out + b_ref[...]).astype(o_ref.dtype)


def lm_head_forward(features, params, *, eps=1e-5, tm=256, tn=1024, tk=512):
    """features: [batch, seq, hidden] float32 -> logits [batch, seq, vocab]."""
    B, S, H = features.shape
    V = params["dec_b"].shape[-1]
    N = B * S
    x2d = features.reshape(N, H)

    # VMEM-aware caps: each (double-buffered) bf16 weight tile <= ~4 MiB/buffer.
    weight_budget = 4 << 20
    tk = _cap_by_bytes(tk, H, 2, weight_budget, 128)   # dense_w tile is (tk, H)
    tn = _cap_by_bytes(tn, H, 2, weight_budget, 128)   # dec_w tile is (H, tn)

    tm = _choose_tile(N, tm, 16)    # row tile (bf16 packs 16 rows per vreg)
    tn = _choose_tile(V, tn, 128)   # vocab (lane) tile
    tk = _choose_tile(H, tk, 128)   # contraction tile for the dense matmul

    n_row, n_k, n_voc = N // tm, H // tk, V // tn

    # --- fused dense + gelu + layernorm (K-tiled, f32 accumulator) ---
    dense_vmem = (2 * tm * tk * 4          # x tiles (f32, double-buffered)
                  + 2 * tk * H * 2         # dense_w tiles (bf16)
                  + 2 * tm * H * 2         # out tiles (bf16)
                  + tm * H * 4             # f32 accumulator scratch
                  + 3 * 2 * H * 4)         # bias / gamma / beta
    dense_cost = pl.CostEstimate(
        flops=2 * N * H * H + 10 * N * H,
        transcendentals=N * H,
        bytes_accessed=N * H * 4 + H * H * 2 + N * H * 2 + 3 * H * 4)

    hidden = pl.pallas_call(
        functools.partial(dense_gelu_ln_kernel, eps=eps),
        out_shape=jax.ShapeDtypeStruct((N, H), jnp.bfloat16),
        grid_spec=pltpu.PrefetchScalarGridSpec(
            num_scalar_prefetch=0,
            grid=(n_row, n_k),                                 # reduction last
            in_specs=[
                pl.BlockSpec((tm, tk), lambda i, k: (i, k)),   # x tile
                pl.BlockSpec((tk, H), lambda i, k: (k, 0)),    # dense_w (bf16)
                pl.BlockSpec((1, H), lambda i, k: (0, 0)),     # dense bias
                pl.BlockSpec((1, H), lambda i, k: (0, 0)),     # ln gamma
                pl.BlockSpec((1, H), lambda i, k: (0, 0)),     # ln beta
            ],
            out_specs=pl.BlockSpec((tm, H), lambda i, k: (i, 0)),
            scratch_shapes=[pltpu.VMEM((tm, H), jnp.float32)],
        ),
        compiler_params=pltpu.CompilerParams(
            dimension_semantics=("parallel", "arbitrary"),
            vmem_limit_bytes=min(int(1.5 * dense_vmem) + (4 << 20), 64 << 20)),
        cost_estimate=dense_cost,
    )(x2d, params["dense_w"], params["dense_b"], params["ln_g"], params["ln_b"])

    # --- decoder projection to vocab ---
    # Vocab axis is OUTER so each (H, tn) dec_w tile is fetched from HBM
    # exactly once (block index constant across the inner row axis); the much
    # smaller bf16 hidden tile is re-streamed instead (tn >= tm keeps that the
    # cheaper direction).
    dec_vmem = (2 * tm * H * 2             # hidden tiles (bf16)
                + 2 * H * tn * 2           # dec_w tiles (bf16)
                + 2 * tm * tn * 4          # logits tiles (f32)
                + 2 * tn * 4)              # bias tile
    dec_cost = pl.CostEstimate(
        flops=2 * N * H * V,
        transcendentals=0,
        bytes_accessed=N * H * 2 + H * V * 2 + N * V * 4 + V * 4)

    logits = pl.pallas_call(
        decoder_kernel,
        out_shape=jax.ShapeDtypeStruct((N, V), jnp.float32),
        grid_spec=pltpu.PrefetchScalarGridSpec(
            num_scalar_prefetch=0,
            grid=(n_voc, n_row),
            in_specs=[
                pl.BlockSpec((tm, H), lambda j, i: (i, 0)),    # hidden (bf16)
                pl.BlockSpec((H, tn), lambda j, i: (0, j)),    # dec_w (bf16)
                pl.BlockSpec((1, tn), lambda j, i: (0, j)),    # dec bias
            ],
            out_specs=pl.BlockSpec((tm, tn), lambda j, i: (i, j)),
        ),
        compiler_params=pltpu.CompilerParams(
            dimension_semantics=("parallel", "parallel"),
            vmem_limit_bytes=min(int(1.5 * dec_vmem) + (4 << 20), 64 << 20)),
        cost_estimate=dec_cost,
    )(hidden, params["dec_w"], params["dec_b"])

    return logits.reshape(B, S, V)


def init_params(key, hidden_size, vocab_size):
    k1, k2 = jax.random.split(key)
    scale = 0.02
    return {
        # weights stored [in, out] so kernel does x @ W + b (== torch x @ W.T + b)
        "dense_w": (scale * jax.random.normal(
            k1, (hidden_size, hidden_size), jnp.float32)).astype(jnp.bfloat16),
        "dense_b": jnp.zeros((1, hidden_size), jnp.float32),
        "ln_g": jnp.ones((1, hidden_size), jnp.float32),
        "ln_b": jnp.zeros((1, hidden_size), jnp.float32),
        "dec_w": (scale * jax.random.normal(
            k2, (hidden_size, vocab_size), jnp.float32)).astype(jnp.bfloat16),
        "dec_b": jnp.zeros((1, vocab_size), jnp.float32),  # tied decoder bias
    }


if __name__ == "__main__":
    BATCH, SEQ, HIDDEN, VOCAB = 2, 16, 256, 1024
    LAYER_NORM_EPS = 1e-5

    key = jax.random.PRNGKey(0)
    k_feat, k_params = jax.random.split(key)
    features = jax.random.normal(k_feat, (BATCH, SEQ, HIDDEN), jnp.float32)
    params = init_params(k_params, HIDDEN, VOCAB)

    # Small tiles here purely to exercise the row / vocab / K grid axes on the
    # tiny test problem; production sizes use the (256, 1024, 512) defaults.
    logits = lm_head_forward(features, params, eps=LAYER_NORM_EPS,
                             tm=16, tn=512, tk=128)
    logits = jax.block_until_ready(logits)

    # sanity: pure-JAX f32 reference (bf16 weights upcast); loose tolerance
    # accounts for bf16 matmul inputs and the bf16 hidden intermediate.
    x2d = features.reshape(-1, HIDDEN)
    dw = params["dense_w"].astype(jnp.float32)
    vw = params["dec_w"].astype(jnp.float32)
    h = x2d @ dw + params["dense_b"]
    h = 0.5 * h * (1.0 + jax.lax.erf(h * 0.7071067811865476))
    mu = h.mean(-1, keepdims=True)
    var = ((h - mu) ** 2).mean(-1, keepdims=True)
    h = (h - mu) * jax.lax.rsqrt(var + LAYER_NORM_EPS)
    h = h * params["ln_g"] + params["ln_b"]
    ref = (h @ vw + params["dec_b"]).reshape(BATCH, SEQ, VOCAB)

    assert logits.shape == (BATCH, SEQ, VOCAB)
    max_err = float(jnp.max(jnp.abs(logits - ref)))
    assert max_err < 5e-2, f"max |err| = {max_err}"
    print("KERNEL_OK")
</pallas_src>

<mosaic_0001>
module attributes {stable_mosaic.version = 11 : i64} {
  func.func @dense_gelu_ln_kernel(%arg0: i32, %arg1: i32, %arg2: memref<16x128xf32, #tpu.memory_space<vmem>>, %arg3: memref<128x256xbf16, #tpu.memory_space<vmem>>, %arg4: memref<1x256xf32, #tpu.memory_space<vmem>>, %arg5: memref<1x256xf32, #tpu.memory_space<vmem>>, %arg6: memref<1x256xf32, #tpu.memory_space<vmem>>, %arg7: memref<16x256xbf16, #tpu.memory_space<vmem>>, %arg8: memref<16x256xf32, #tpu.memory_space<vmem>>) attributes {dimension_semantics = [#tpu.dimension_semantics<parallel>, #tpu.dimension_semantics<arbitrary>], iteration_bounds = array<i64: 2, 2>, scalar_prefetch = 0 : i64, scratch_operands = 1 : i64, tpu.core_type = #tpu.core_type<tc>, window_params = [{transform_indices = @transform_0, window_bounds = array<i64: 16, 128>}, {transform_indices = @transform_1, window_bounds = array<i64: 128, 256>}, {pipeline_mode = #tpu.pipeline_mode<synchronous>, transform_indices = @transform_2, window_bounds = array<i64: 1, 256>}, {pipeline_mode = #tpu.pipeline_mode<synchronous>, transform_indices = @transform_3, window_bounds = array<i64: 1, 256>}, {pipeline_mode = #tpu.pipeline_mode<synchronous>, transform_indices = @transform_4, window_bounds = array<i64: 1, 256>}, {transform_indices = @transform_5, window_bounds = array<i64: 16, 256>}]} {
    %c0_i32 = arith.constant 0 : i32
    %0 = arith.cmpi eq, %arg1, %c0_i32 : i32
    %1 = arith.extui %0 : i1 to i32
    %c0_i32_0 = arith.constant 0 : i32
    %2 = arith.cmpi ne, %1, %c0_i32_0 : i32
    scf.if %2 {
      %cst_9 = arith.constant 0.000000e+00 : f32
      %13 = vector.broadcast %cst_9 : f32 to vector<16x256xf32>
      %c0_10 = arith.constant 0 : index
      %c0_11 = arith.constant 0 : index
      %14 = vector.load %arg8[%c0_10, %c0_11] : memref<16x256xf32, #tpu.memory_space<vmem>>, vector<16x256xf32>
      tpu.vector_store %arg8[%c0_10, %c0_11], %13 {strides = array<i32>} : memref<16x256xf32, #tpu.memory_space<vmem>>, vector<16x256xf32>,
    } else {
    }
    %c0 = arith.constant 0 : index
    %c0_1 = arith.constant 0 : index
    %3 = vector.load %arg8[%c0, %c0_1] : memref<16x256xf32, #tpu.memory_space<vmem>>, vector<16x256xf32>
    %c0_2 = arith.constant 0 : index
    %c0_3 = arith.constant 0 : index
    %4 = vector.load %arg2[%c0_2, %c0_3] : memref<16x128xf32, #tpu.memory_space<vmem>>, vector<16x128xf32>
    %5 = arith.truncf %4 : vector<16x128xf32> to vector<16x128xbf16>
    %c0_4 = arith.constant 0 : index
    %c0_5 = arith.constant 0 : index
    %6 = vector.load %arg3[%c0_4, %c0_5] : memref<128x256xbf16, #tpu.memory_space<vmem>>, vector<128x256xbf16>
    %cst = arith.constant dense<0.000000e+00> : vector<16x256xf32>
    %7 = tpu.matmul %5, %6, %cst {dimension_numbers = #tpu.dot_dimension_numbers<[1], [0], [0], [1], [0, 0, 1, 1], [], []>} : vector<16x128xbf16>, vector<128x256xbf16>, vector<16x256xf32> -> vector<16x256xf32>
    %8 = arith.addf %3, %7 : vector<16x256xf32>
    %c0_6 = arith.constant 0 : index
    %c0_7 = arith.constant 0 : index
    %9 = vector.load %arg8[%c0_6, %c0_7] : memref<16x256xf32, #tpu.memory_space<vmem>>, vector<16x256xf32>
    tpu.vector_store %arg8[%c0_6, %c0_7], %8 {strides = array<i32>} : memref<16x256xf32, #tpu.memory_space<vmem>>, vector<16x256xf32>,
    %c1_i32 = arith.constant 1 : i32
    %10 = arith.cmpi eq, %arg1, %c1_i32 : i32
    %11 = arith.extui %10 : i1 to i32
    %c0_i32_8 = arith.constant 0 : i32
    %12 = arith.cmpi ne, %11, %c0_i32_8 : i32
    scf.if %12 {
      %c0_9 = arith.constant 0 : index
      %c0_10 = arith.constant 0 : index
      %13 = vector.load %arg8[%c0_9, %c0_10] : memref<16x256xf32, #tpu.memory_space<vmem>>, vector<16x256xf32>
      %c0_11 = arith.constant 0 : index
      %c0_12 = arith.constant 0 : index
      %14 = vector.load %arg4[%c0_11, %c0_12] : memref<1x256xf32, #tpu.memory_space<vmem>>, vector<1x256xf32>
      %15 = vector.broadcast %14 : vector<1x256xf32> to vector<16x256xf32>
      %16 = arith.addf %13, %15 : vector<16x256xf32>
      %cst_13 = arith.constant 5.000000e-01 : f32
      %17 = vector.broadcast %cst_13 : f32 to vector<16x256xf32>
      %18 = arith.mulf %17, %16 : vector<16x256xf32>
      %cst_14 = arith.constant 0.707106769 : f32
      %19 = vector.broadcast %cst_14 : f32 to vector<16x256xf32>
      %20 = arith.mulf %16, %19 : vector<16x256xf32>
      %21 = math.erf %20 : vector<16x256xf32>
      %cst_15 = arith.constant 1.000000e+00 : f32
      %22 = vector.broadcast %cst_15 : f32 to vector<16x256xf32>
      %23 = arith.addf %22, %21 : vector<16x256xf32>
      %24 = arith.mulf %18, %23 : vector<16x256xf32>
      %cst_16 = arith.constant dense<0.000000e+00> : vector<16xf32>
      %25 = vector.multi_reduction <add>, %24, %cst_16 [1] : vector<16x256xf32> to vector<16xf32>
      %26 = vector.shape_cast %25 : vector<16xf32> to vector<16x1xf32>
      %cst_17 = arith.constant 2.560000e+02 : f32
      %27 = vector.broadcast %cst_17 : f32 to vector<16x1xf32>
      %28 = arith.divf %26, %27 : vector<16x1xf32>
      %29 = vector.broadcast %28 : vector<16x1xf32> to vector<16x256xf32>
      %30 = arith.subf %24, %29 : vector<16x256xf32>
      %31 = vector.broadcast %28 : vector<16x1xf32> to vector<16x256xf32>
      %32 = arith.subf %24, %31 : vector<16x256xf32>
      %33 = arith.mulf %30, %32 : vector<16x256xf32>
      %cst_18 = arith.constant dense<0.000000e+00> : vector<16xf32>
      %34 = vector.multi_reduction <add>, %33, %cst_18 [1] : vector<16x256xf32> to vector<16xf32>
      %35 = vector.shape_cast %34 : vector<16xf32> to vector<16x1xf32>
      %cst_19 = arith.constant 2.560000e+02 : f32
      %36 = vector.broadcast %cst_19 : f32 to vector<16x1xf32>
      %37 = arith.divf %35, %36 : vector<16x1xf32>
      %38 = vector.broadcast %28 : vector<16x1xf32> to vector<16x256xf32>
      %39 = arith.subf %24, %38 : vector<16x256xf32>
      %cst_20 = arith.constant 9.99999974E-6 : f32
      %40 = vector.broadcast %cst_20 : f32 to vector<16x1xf32>
      %41 = arith.addf %37, %40 : vector<16x1xf32>
      %42 = math.rsqrt %41 : vector<16x1xf32>
      %43 = vector.broadcast %42 : vector<16x1xf32> to vector<16x256xf32>
      %44 = arith.mulf %39, %43 : vector<16x256xf32>
      %c0_21 = arith.constant 0 : index
      %c0_22 = arith.constant 0 : index
      %45 = vector.load %arg5[%c0_21, %c0_22] : memref<1x256xf32, #tpu.memory_space<vmem>>, vector<1x256xf32>
      %46 = vector.broadcast %45 : vector<1x256xf32> to vector<16x256xf32>
      %47 = arith.mulf %44, %46 : vector<16x256xf32>
      %c0_23 = arith.constant 0 : index
      %c0_24 = arith.constant 0 : index
      %48 = vector.load %arg6[%c0_23, %c0_24] : memref<1x256xf32, #tpu.memory_space<vmem>>, vector<1x256xf32>
      %49 = vector.broadcast %48 : vector<1x256xf32> to vector<16x256xf32>
      %50 = arith.addf %47, %49 : vector<16x256xf32>
      %51 = arith.truncf %50 : vector<16x256xf32> to vector<16x256xbf16>
      %c0_25 = arith.constant 0 : index
      %c0_26 = arith.constant 0 : index
      %52 = vector.load %arg7[%c0_25, %c0_26] : memref<16x256xbf16, #tpu.memory_space<vmem>>, vector<16x256xbf16>
      tpu.vector_store %arg7[%c0_25, %c0_26], %51 {strides = array<i32>} : memref<16x256xbf16, #tpu.memory_space<vmem>>, vector<16x256xbf16>,
    } else {
    }
    return
  }
  func.func @transform_0(%arg0: i32, %arg1: i32) -> (i32, i32) {
    %c0_i32 = arith.constant 0 : i32
    return %arg0, %arg1 : i32, i32
  }
  func.func @transform_1(%arg0: i32, %arg1: i32) -> (i32, i32) {
    %c0_i32 = arith.constant 0 : i32
    %c0_i32_0 = arith.constant 0 : i32
    return %arg1, %c0_i32 : i32, i32
  }
  func.func @transform_2(%arg0: i32, %arg1: i32) -> (i32, i32) {
    %c0_i32 = arith.constant 0 : i32
    %c0_i32_0 = arith.constant 0 : i32
    %c0_i32_1 = arith.constant 0 : i32
    return %c0_i32, %c0_i32_0 : i32, i32
  }
  func.func @transform_3(%arg0: i32, %arg1: i32) -> (i32, i32) {
    %c0_i32 = arith.constant 0 : i32
    %c0_i32_0 = arith.constant 0 : i32
    %c0_i32_1 = arith.constant 0 : i32
    return %c0_i32, %c0_i32_0 : i32, i32
  }
  func.func @transform_4(%arg0: i32, %arg1: i32) -> (i32, i32) {
    %c0_i32 = arith.constant 0 : i32
    %c0_i32_0 = arith.constant 0 : i32
    %c0_i32_1 = arith.constant 0 : i32
    return %c0_i32, %c0_i32_0 : i32, i32
  }
  func.func @transform_5(%arg0: i32, %arg1: i32) -> (i32, i32) {
    %c0_i32 = arith.constant 0 : i32
    %c0_i32_0 = arith.constant 0 : i32
    return %arg0, %c0_i32 : i32, i32
  }
}

</mosaic_0001>

<llo_original>
// kernel: tpu_custom_call.1
$region0: #{tpu_custom_call.1}
  #allocation0 [shape = 'u32[]', space=smem, size = 0x4, offset = 0x4, fixed_abs, tag = 'smem constant byte address 0x4 - core index']
  #allocation1 [shape = 'u32[72,128]{1,0:T(1,128)}', space=vmem, size = 0x9000, scoped, tag = 'internal scratch']
  #allocation2 [shape = 'f32[16,256]{1,0:T(8,128)}', space=vmem, size = 0x4000, scoped, tag = 'scratch operand']
  %s0 = inlined_call_operand.hbm [shape: f32[32,256], index: 0, kind: input, shape index: {}]
  %s1 = inlined_call_operand.hbm [shape: bf16[256,256], index: 1, kind: input, shape index: {}]
  %s2 = inlined_call_operand.hbm [shape: f32[1,256], index: 2, kind: input, shape index: {}]
  %s3 = inlined_call_operand.vmem [shape: f32[1,256], index: 3, kind: input, shape index: {}]
  %s4 = inlined_call_operand.hbm [shape: f32[1,256], index: 4, kind: input, shape index: {}]
  %s5 = inlined_call_operand.hbm [shape: bf16[32,256], index: 5, kind: output, shape index: {}]
  %s6 = sld [smem:[#allocation0]]
  $region77: #{tpu_custom_call.1} parent=0
    _
  %s8 = ssub.s32 1, %s6
  %s9 = scalar_select 0, %s8, %s6
  $region1: #{tpu_custom_call.1} parent=0
    #allocation3 [shape = 'u8[16384]{0}', space=vmem, size = 0x4000, scoped, tag = 'input window, operand 0']
    #allocation4 [shape = 's32[2]{0}', space=sflag, size = 0x8, scoped, tag = 'scoped memory for tpu_custom_call.1']
    #allocation5 [shape = 's32[2]{0}', space=sflag, size = 0x8, scoped, tag = 'scoped memory for tpu_custom_call.1']
    #allocation6 [shape = 'u8[131072]{0}', space=vmem, size = 0x20000, scoped, tag = 'input window, operand 1']
    #allocation7 [shape = 's32[2]{0}', space=sflag, size = 0x8, scoped, tag = 'scoped memory for tpu_custom_call.1']
    #allocation8 [shape = 'u8[1024]{0}', space=vmem, size = 0x400, scoped, tag = 'input window, operand 2, single buffered']
    #allocation9 [shape = 'u8[1024]{0}', space=vmem, size = 0x400, scoped, tag = 'input window, operand 4, single buffered']
    #allocation10 [shape = 's32[1]{0}', space=sflag, size = 0x4, scoped, tag = 'scoped memory for tpu_custom_call.1']
    #allocation11 [shape = 'u8[16384]{0}', space=vmem, size = 0x4000, scoped, tag = 'output window, operand 0']
    %10 = vsyncpa [#allocation4], 0
    %s11 = scalar_lea.sflag [#allocation4], 1
    %12 = vsyncpa %s11, 0
    %13 = vsyncpa [#allocation7], 0
    %s14 = scalar_lea.sflag [#allocation7], 1
    %15 = vsyncpa %s14, 0
    %16 = vsyncpa [#allocation10], 0
    %17 = vsyncpa [#allocation5], 0
    %s18 = scalar_lea.sflag [#allocation5], 1
    %19 = vsyncpa %s18, 0
    loop: start=0, step=1, limit=6
    $region2: #{tpu_custom_call.1} parent=1 // loop_pre_header
      _
    $region3: #{tpu_custom_call.1} parent=1 // loop_header
      %s21 = sphi 0, %s25
      %p22 = scmp.ge.s32.totalorder %s21, 6
      %s28 = sphi 0, %s40
      %s29 = sphi 0, %s36
      %s30 = sphi 0, %s28
      %s31 = sphi 0, %s29
      %s32 = sphi 0, %s30
      %s33 = sphi 0, %s31
      %s45 = sphi 0, %s47
      %s48 = sphi 0, %s45
      %s49 = sphi 0, %s48
      %s65 = sphi 0, %s49
      %s71 = sphi 0, %s73
      %s74 = sphi 0, %s71
      %s75 = sphi 0, %s74
      %s91 = sphi 0, %s75
      %s95 = sphi 0, %s95
      %s97 = sphi 0, %s95
      %s98 = sphi 0, %s97
      %s112 = sphi 0, %s98
      %s116 = sphi 0, %s116
      %s118 = sphi 0, %s116
      %s119 = sphi 0, %s118
      %s133 = sphi 0, %s119
      %s137 = sphi 0, %s137
      %s139 = sphi 0, %s137
      %s140 = sphi 0, %s139
      %s154 = sphi 0, %s140
      %s160 = sphi 0, %s162
      %s163 = sphi 0, %s160
      %s164 = sphi 0, %s163
      %s180 = sphi 0, %s164
    $region4: #{tpu_custom_call.1} parent=1 // loop_header_branch
      %24 = sbr.rel (%p22) target = $region8
    $region5: #{tpu_custom_call.1} parent=1 // loop_body
      %s26 = ssub.s32 %s21, 1
      %s27 = ssub.s32 %s21, 2
      %s34 = sadd.s32 1, %s29
      %p35 = scmp.ge.s32.totalorder %s34, 2
      %s36 = scalar_select %p35, 0, %s34
      %s37 = sadd.s32 1, %s28
      %s38 = scalar_select %p35, %s37, %s28
      %p39 = scmp.ge.s32.totalorder %s38, 2
      %s40 = scalar_select %p39, 0, %s38
      %s41 = ssub.s32 %s28, %s40
      %s42 = ssub.s32 %s29, %s36
      %s43 = sor.u32 %s41, %s42
      %p44 = scmp.eq.s32.totalorder %s43, 0
      %s46 = sadd.s32 %s45, 1
      %s47 = scalar_select %p44, %s45, %s46
      %p50 = pneg %p44
      %p51 = scmp.eq.s32.totalorder %s21, 3
      %p52 = por %p50, %p51
      %p53 = scmp.ne.s32.totalorder %s45, %s48
      %p54 = scmp.eq.s32.totalorder %s21, 0
      %p55 = por %p53, %p54
      %p56 = scmp.ne.s32.totalorder %s45, %s48
      %p57 = scmp.eq.s32.totalorder %s26, 3
      %p58 = por %p56, %p57
      %p59 = scmp.ne.s32.totalorder %s48, %s49
      %p60 = scmp.eq.s32.totalorder %s26, 0
      %p61 = por %p59, %p60
      %p62 = scmp.ne.s32.totalorder %s48, %s49
      %p63 = scmp.eq.s32.totalorder %s27, 3
      %p64 = por %p62, %p63
      %p66 = scmp.ne.s32.totalorder %s49, %s65
      %p67 = scmp.eq.s32.totalorder %s27, 0
      %p68 = por %p66, %p67
      %s69 = ssub.s32 %s29, %s36
      %p70 = scmp.eq.s32.totalorder %s69, 0
      %s72 = sadd.s32 %s71, 1
      %s73 = scalar_select %p70, %s71, %s72
      %p76 = pneg %p70
      %p77 = scmp.eq.s32.totalorder %s21, 3
      %p78 = por %p76, %p77
      %p79 = scmp.ne.s32.totalorder %s71, %s74
      %p80 = scmp.eq.s32.totalorder %s21, 0
      %p81 = por %p79, %p80
      %p82 = scmp.ne.s32.totalorder %s71, %s74
      %p83 = scmp.eq.s32.totalorder %s26, 3
      %p84 = por %p82, %p83
      %p85 = scmp.ne.s32.totalorder %s74, %s75
      %p86 = scmp.eq.s32.totalorder %s26, 0
      %p87 = por %p85, %p86
      %p88 = scmp.ne.s32.totalorder %s74, %s75
      %p89 = scmp.eq.s32.totalorder %s27, 3
      %p90 = por %p88, %p89
      %p92 = scmp.ne.s32.totalorder %s75, %s91
      %p93 = scmp.eq.s32.totalorder %s27, 0
      %p94 = por %p92, %p93
      %s96 = sadd.s32 %s95, 1
      %p99 = scmp.eq.s32.totalorder %s21, 3
      %p100 = scmp.ne.s32.totalorder %s95, %s97
      %p101 = scmp.eq.s32.totalorder %s21, 0
      %p102 = por %p100, %p101
      %p103 = scmp.ne.s32.totalorder %s95, %s97
      %p104 = scmp.eq.s32.totalorder %s26, 3
      %p105 = por %p103, %p104
      %p106 = scmp.ne.s32.totalorder %s97, %s98
      %p107 = scmp.eq.s32.totalorder %s26, 0
      %p108 = por %p106, %p107
      %p109 = scmp.ne.s32.totalorder %s97, %s98
      %p110 = scmp.eq.s32.totalorder %s27, 3
      %p111 = por %p109, %p110
      %p113 = scmp.ne.s32.totalorder %s98, %s112
      %p114 = scmp.eq.s32.totalorder %s27, 0
      %p115 = por %p113, %p114
      %s117 = sadd.s32 %s116, 1
      %p120 = scmp.eq.s32.totalorder %s21, 3
      %p121 = scmp.ne.s32.totalorder %s116, %s118
      %p122 = scmp.eq.s32.totalorder %s21, 0
      %p123 = por %p121, %p122
      %p124 = scmp.ne.s32.totalorder %s116, %s118
      %p125 = scmp.eq.s32.totalorder %s26, 3
      %p126 = por %p124, %p125
      %p127 = scmp.ne.s32.totalorder %s118, %s119
      %p128 = scmp.eq.s32.totalorder %s26, 0
      %p129 = por %p127, %p128
      %p130 = scmp.ne.s32.totalorder %s118, %s119
      %p131 = scmp.eq.s32.totalorder %s27, 3
      %p132 = por %p130, %p131
      %p134 = scmp.ne.s32.totalorder %s119, %s133
      %p135 = scmp.eq.s32.totalorder %s27, 0
      %p136 = por %p134, %p135
      %s138 = sadd.s32 %s137, 1
      %p141 = scmp.eq.s32.totalorder %s21, 3
      %p142 = scmp.ne.s32.totalorder %s137, %s139
      %p143 = scmp.eq.s32.totalorder %s21, 0
      %p144 = por %p142, %p143
      %p145 = scmp.ne.s32.totalorder %s137, %s139
      %p146 = scmp.eq.s32.totalorder %s26, 3
      %p147 = por %p145, %p146
      %p148 = scmp.ne.s32.totalorder %s139, %s140
      %p149 = scmp.eq.s32.totalorder %s26, 0
      %p150 = por %p148, %p149
      %p151 = scmp.ne.s32.totalorder %s139, %s140
      %p152 = scmp.eq.s32.totalorder %s27, 3
      %p153 = por %p151, %p152
      %p155 = scmp.ne.s32.totalorder %s140, %s154
      %p156 = scmp.eq.s32.totalorder %s27, 0
      %p157 = por %p155, %p156
      %s158 = ssub.s32 %s28, %s40
      %p159 = scmp.eq.s32.totalorder %s158, 0
      %s161 = sadd.s32 %s160, 1
      %s162 = scalar_select %p159, %s160, %s161
      %p165 = pneg %p159
      %p166 = scmp.eq.s32.totalorder %s21, 3
      %p167 = por %p165, %p166
      %p168 = scmp.ne.s32.totalorder %s160, %s163
      %p169 = scmp.eq.s32.totalorder %s21, 0
      %p170 = por %p168, %p169
      %p171 = scmp.ne.s32.totalorder %s160, %s163
      %p172 = scmp.eq.s32.totalorder %s26, 3
      %p173 = por %p171, %p172
      %p174 = scmp.ne.s32.totalorder %s163, %s164
      %p175 = scmp.eq.s32.totalorder %s26, 0
      %p176 = por %p174, %p175
      %p177 = scmp.ne.s32.totalorder %s163, %s164
      %p178 = scmp.eq.s32.totalorder %s27, 3
      %p179 = por %p177, %p178
      %p181 = scmp.ne.s32.totalorder %s164, %s180
      %p182 = scmp.eq.s32.totalorder %s27, 0
      %p183 = por %p181, %p182
      %p184 = scmp.le.s32.totalorder 1, %s21
      %p185 = scmp.lt.s32.totalorder %s21, 5
      %p186 = pnand %p184, %p185
      %p187 = pneg %p186
      // Predicated region
      $region9: #{tpu_custom_call.1} parent=5 // pred_check
        _
      $region10: #{tpu_custom_call.1} parent=5 // pred_check_branch
        %189 = sbr.rel (%p186) target = $region12
      $region11: #{tpu_custom_call.1} parent=5 // pred_region
        %s190 = ssub.s32 %s21, 1
        // Predicated region
        $region13: #{tpu_custom_call.1} parent=11 // pred_check
          %p191 = pneg %p108
        $region14: #{tpu_custom_call.1} parent=11 // pred_check_branch
          %193 = sbr.rel (%p191) target = $region16
        $region15: #{tpu_custom_call.1} parent=11 // pred_region
          %195 = vsyncadd [#allocation7], 0
          %s197 = sshll.u32 %s2, 4
          %s198 = int_to_ptr.hbm [resolvable:$true] %s197
          %s199 = sshll.u32 [#allocation8], 4
          %s200 = int_to_ptr.vmem [resolvable:$true] %s199
          %202 = dma.hbm_to_vmem [thread:$0]  %s198, 32, %s200, [#allocation7]
        $region16: #{tpu_custom_call.1} parent=11 // pred_fallthru
          _
        // Predicated region
        $region17: #{tpu_custom_call.1} parent=11 // pred_check
          %p203 = pneg %p129
        $region18: #{tpu_custom_call.1} parent=11 // pred_check_branch
          %205 = sbr.rel (%p203) target = $region20
        $region19: #{tpu_custom_call.1} parent=11 // pred_region
          _
        $region20: #{tpu_custom_call.1} parent=11 // pred_fallthru
          _
        // Predicated region
        $region21: #{tpu_custom_call.1} parent=11 // pred_check
          %p206 = pneg %p150
        $region22: #{tpu_custom_call.1} parent=11 // pred_check_branch
          %208 = sbr.rel (%p206) target = $region24
        $region23: #{tpu_custom_call.1} parent=11 // pred_region
          %210 = vsyncadd [#allocation10], 0
          %s212 = sshll.u32 %s4, 4
          %s213 = int_to_ptr.hbm [resolvable:$true] %s212
          %s214 = sshll.u32 [#allocation9], 4
          %s215 = int_to_ptr.vmem [resolvable:$true] %s214
          %217 = dma.hbm_to_vmem [thread:$0]  %s213, 32, %s215, [#allocation10]
        $region24: #{tpu_custom_call.1} parent=11 // pred_fallthru
          _
      $region12: #{tpu_custom_call.1} parent=5 // pred_fallthru
        _
      %p218 = scmp.lt.s32.totalorder %s21, 4
      // Predicated region
      $region25: #{tpu_custom_call.1} parent=5 // pred_check
        %p219 = pneg %p218
      $region26: #{tpu_custom_call.1} parent=5 // pred_check_branch
        %221 = sbr.rel (%p219) target = $region28
      $region27: #{tpu_custom_call.1} parent=5 // pred_region
        // Predicated region
        $region29: #{tpu_custom_call.1} parent=27 // pred_check
          %p222 = pneg %p55
        $region30: #{tpu_custom_call.1} parent=27 // pred_check_branch
          %224 = sbr.rel (%p222) target = $region32
        $region31: #{tpu_custom_call.1} parent=27 // pred_region
          %s225 = sand.u32 %s45, 1
          %s226 = scalar_lea.sflag [#allocation4], %s225
          %s227 = sand.u32 %s45, 1
          %s228 = smul.addr %s227, 16
          %s229 = scalar_lea.vmem [#allocation3], %s228
          %s230 = smul.u32 2, %s28
          %232 = vsyncadd %s226, 0
          %s233 = smul.addr %s230, 2
          %s234 = sadd.s32 %s29, %s233
          %s235 = smul.addr %s234, 8
          %s236 = scalar_lea.hbm %s0, %s235
          %s237 = sshll.u32 %s236, 4
          %s238 = int_to_ptr.hbm [resolvable:$true] %s237
          %s239 = sshll.u32 %s229, 4
          %s240 = int_to_ptr.vmem [resolvable:$true] %s239
          %245 = dma.hbm_to_vmem [thread:$0]  %s238, 256, %s240, %s226, 256, 128, 8
        $region32: #{tpu_custom_call.1} parent=27 // pred_fallthru
          _
        // Predicated region
        $region33: #{tpu_custom_call.1} parent=27 // pred_check
          %p246 = pneg %p81
        $region34: #{tpu_custom_call.1} parent=27 // pred_check_branch
          %248 = sbr.rel (%p246) target = $region36
        $region35: #{tpu_custom_call.1} parent=27 // pred_region
          %s249 = sand.u32 %s21, 1
          %s250 = scalar_lea.sflag [#allocation7], %s249
          %s251 = sand.u32 %s71, 1
          %s252 = smul.addr %s251, 128
          %s253 = scalar_lea.vmem [#allocation6], %s252
          %s254 = smul.u32 16, %s29
          %256 = vsyncadd %s250, 0
          %s257 = smul.addr %s254, 2
          %s258 = smul.addr %s257, 4
          %s259 = scalar_lea.hbm %s1, %s258
          %s260 = sshll.u32 %s259, 4
          %s261 = int_to_ptr.hbm [resolvable:$true] %s260
          %s262 = sshll.u32 %s253, 4
          %s263 = int_to_ptr.vmem [resolvable:$true] %s262
          %268 = dma.hbm_to_vmem [thread:$0]  %s261, 2048, %s263, %s250, 128, 128, 8
        $region36: #{tpu_custom_call.1} parent=27 // pred_fallthru
          _
      $region28: #{tpu_custom_call.1} parent=5 // pred_fallthru
        _
      %p269 = scmp.le.s32.totalorder 1, %s21
      %p270 = scmp.lt.s32.totalorder %s21, 5
      %p271 = pnand %p269, %p270
      %p272 = pneg %p271
      // Predicated region
      $region37: #{tpu_custom_call.1} parent=5 // pred_check
        _
      $region38: #{tpu_custom_call.1} parent=5 // pred_check_branch
        %274 = sbr.rel (%p271) target = $region40
      $region39: #{tpu_custom_call.1} parent=5 // pred_region
        %s275 = ssub.s32 %s21, 1
        %s276 = sand.u32 %s48, 1
        %s277 = scalar_lea.sflag [#allocation4], %s276
        %s278 = sand.u32 %s48, 1
        %s279 = smul.addr %s278, 16
        %s280 = scalar_lea.vmem [#allocation3], %s279
        // Predicated region
        $region41: #{tpu_custom_call.1} parent=39 // pred_check
          %p281 = pneg %p61
        $region42: #{tpu_custom_call.1} parent=39 // pred_check_branch
          %283 = sbr.rel (%p281) target = $region44
        $region43: #{tpu_custom_call.1} parent=39 // pred_region
          %285 = dma.done %s277, 256
        $region44: #{tpu_custom_call.1} parent=39 // pred_fallthru
          _
        %s286 = sand.u32 %s26, 1
        %s287 = scalar_lea.sflag [#allocation7], %s286
        %s288 = sand.u32 %s74, 1
        %s289 = smul.addr %s288, 128
        %s290 = scalar_lea.vmem [#allocation6], %s289
        // Predicated region
        $region45: #{tpu_custom_call.1} parent=39 // pred_check
          %p291 = pneg %p87
        $region46: #{tpu_custom_call.1} parent=39 // pred_check_branch
          %293 = sbr.rel (%p291) target = $region48
        $region47: #{tpu_custom_call.1} parent=39 // pred_region
          %295 = dma.done %s287, 2048
        $region48: #{tpu_custom_call.1} parent=39 // pred_fallthru
          _
        // Predicated region
        $region49: #{tpu_custom_call.1} parent=39 // pred_check
          %p296 = pneg %p108
        $region50: #{tpu_custom_call.1} parent=39 // pred_check_branch
          %298 = sbr.rel (%p296) target = $region52
        $region51: #{tpu_custom_call.1} parent=39 // pred_region
          %300 = dma.done [#allocation7], 32
        $region52: #{tpu_custom_call.1} parent=39 // pred_fallthru
          _
        // Predicated region
        $region53: #{tpu_custom_call.1} parent=39 // pred_check
          %p301 = pneg %p150
        $region54: #{tpu_custom_call.1} parent=39 // pred_check_branch
          %303 = sbr.rel (%p301) target = $region56
        $region55: #{tpu_custom_call.1} parent=39 // pred_region
          %305 = dma.done [#allocation10], 32
        $region56: #{tpu_custom_call.1} parent=39 // pred_fallthru
          _
        %s306 = sand.u32 %s48, 1
        %s307 = scalar_lea.sflag [#allocation4], %s306
        %s308 = sand.u32 %s48, 1
        %s309 = smul.addr %s308, 16
        %s310 = scalar_lea.vmem [#allocation3], %s309
        %p311 = pneg %p61
        %p312 = pneg %p58
        %s313 = sand.u32 %s26, 1
        %s314 = scalar_lea.sflag [#allocation7], %s313
        %s315 = sand.u32 %s74, 1
        %s316 = smul.addr %s315, 128
        %s317 = scalar_lea.vmem [#allocation6], %s316
        %p318 = pneg %p87
        %p319 = pneg %p84
        %p320 = pneg %p108
        %p321 = pneg %p105
        %p322 = pneg %p129
        %p323 = pneg %p126
        %p324 = pneg %p150
        %p325 = pneg %p147
        %p326 = pneg %p176
        %p327 = pneg %p173
        %s328 = sand.u32 %s163, 1
        %s329 = scalar_lea.sflag [#allocation5], %s328
        %s330 = sand.u32 %s163, 1
        %s331 = smul.addr %s330, 16
        %s332 = scalar_lea.vmem [#allocation11], %s331
        %s333 = smul.u32 2, %s30
        %s334 = smul.u32 16, %s31
        %s335 = smul.u32 2, %s30
        %p336 = scmp.eq.s32.totalorder %s31, 0
        // Predicated region
        $region57: #{tpu_custom_call.1} parent=39 // pred_check
          %p337 = pneg %p336
        $region58: #{tpu_custom_call.1} parent=39 // pred_check_branch
          %339 = sbr.rel (%p337) target = $region60
        $region59: #{tpu_custom_call.1} parent=39 // pred_region
          %340 = vst [vmem:[#allocation2] sm:$0xff] 0.0
          %341 = vst [vmem:[#allocation2 + $0x8] sm:$0xff] 0.0
          %342 = vst [vmem:[#allocation2 + $0x10] sm:$0xff] 0.0
          %343 = vst [vmem:[#allocation2 + $0x18] sm:$0xff] 0.0
        $region60: #{tpu_custom_call.1} parent=39 // pred_fallthru
          _
        %v344 = vld [vmem:[#allocation2] sm:$0xff]
        %v345 = vld [vmem:[#allocation2 + $0x8] sm:$0xff]
        %v346 = vld [vmem:[#allocation2 + $0x10] sm:$0xff]
        %v347 = vld [vmem:[#allocation2 + $0x18] sm:$0xff]
        %v348 = vld [vmem:[%s280] sm:$0xff]
        %v349 = vld [vmem:[%s280 + $0x8] sm:$0xff]
        %v350 = vpack.c.bf16 %v349, %v348
        %v351 = vld [vmem:[%s290] sm:$0xff]
        %v352 = vld [vmem:[%s290 + $0x8] sm:$0xff]
        %v353 = vld [vmem:[%s290 + $0x10] sm:$0xff]
        %v354 = vld [vmem:[%s290 + $0x18] sm:$0xff]
        %v355 = vld [vmem:[%s290 + $0x20] sm:$0xff]
        %v356 = vld [vmem:[%s290 + $0x28] sm:$0xff]
        %v357 = vld [vmem:[%s290 + $0x30] sm:$0xff]
        %v358 = vld [vmem:[%s290 + $0x38] sm:$0xff]
        %v359 = vld [vmem:[%s290 + $0x40] sm:$0xff]
        %v360 = vld [vmem:[%s290 + $0x48] sm:$0xff]
        %v361 = vld [vmem:[%s290 + $0x50] sm:$0xff]
        %v362 = vld [vmem:[%s290 + $0x58] sm:$0xff]
        %v363 = vld [vmem:[%s290 + $0x60] sm:$0xff]
        %v364 = vld [vmem:[%s290 + $0x68] sm:$0xff]
        %v365 = vld [vmem:[%s290 + $0x70] sm:$0xff]
        %v366 = vld [vmem:[%s290 + $0x78] sm:$0xff]
        %v383 = vunpack.c.l.b16 %v351
        %v384 = vunpack.c.h.b16 %v351
        %v385 = vunpack.c.l.b16 %v352
        %v386 = vunpack.c.h.b16 %v352
        %v387 = vunpack.c.l.b16 %v353
        %v388 = vunpack.c.h.b16 %v353
        %v389 = vunpack.c.l.b16 %v354
        %v390 = vunpack.c.h.b16 %v354
        %v391 = vunpack.c.l.b16 %v355
        %v392 = vunpack.c.h.b16 %v355
        %v393 = vunpack.c.l.b16 %v356
        %v394 = vunpack.c.h.b16 %v356
        %v395 = vunpack.c.l.b16 %v357
        %v396 = vunpack.c.h.b16 %v357
        %v397 = vunpack.c.l.b16 %v358
        %v398 = vunpack.c.h.b16 %v358
        %v399 = vunpack.c.l.b16 %v359
        %v400 = vunpack.c.h.b16 %v359
        %v401 = vunpack.c.l.b16 %v360
        %v402 = vunpack.c.h.b16 %v360
        %v403 = vunpack.c.l.b16 %v361
        %v404 = vunpack.c.h.b16 %v361
        %v405 = vunpack.c.l.b16 %v362
        %v406 = vunpack.c.h.b16 %v362
        %v407 = vunpack.c.l.b16 %v363
        %v408 = vunpack.c.h.b16 %v363
        %v409 = vunpack.c.l.b16 %v364
        %v410 = vunpack.c.h.b16 %v364
        %v411 = vunpack.c.l.b16 %v365
        %v412 = vunpack.c.h.b16 %v365
        %v413 = vunpack.c.l.b16 %v366
        %v414 = vunpack.c.h.b16 %v366
        %v415 = vpack.c.b16 %v385, %v383
        %v416 = vpack.c.b16 %v386, %v384
        %v417 = vpack.c.b16 %v389, %v387
        %v418 = vpack.c.b16 %v390, %v388
        %v419 = vpack.c.b16 %v393, %v391
        %v420 = vpack.c.b16 %v394, %v392
        %v421 = vpack.c.b16 %v397, %v395
        %v422 = vpack.c.b16 %v398, %v396
        %v423 = vpack.c.b16 %v401, %v399
        %v424 = vpack.c.b16 %v402, %v400
        %v425 = vpack.c.b16 %v405, %v403
        %v426 = vpack.c.b16 %v406, %v404
        %v427 = vpack.c.b16 %v409, %v407
        %v428 = vpack.c.b16 %v410, %v408
        %v429 = vpack.c.b16 %v413, %v411
        %v430 = vpack.c.b16 %v414, %v412
        %447 = vmatpush.bf16.msra.mxu0 %v429
        %448 = vmatpush.bf16.msra.mxu0 %v427
        %449 = vmatpush.bf16.msra.mxu0 %v425
        %450 = vmatpush.bf16.msra.mxu0 %v423
        %451 = vmatpush.bf16.msra.mxu0 %v421
        %452 = vmatpush.bf16.msra.mxu0 %v419
        %453 = vmatpush.bf16.msra.mxu0 %v417
        %454 = vmatpush.bf16.msra.mxu0 %v415
        %455 = vmatmul.bf16.gmra.mxu0 %v350
        %v456 = vpop.f32.mrf.mxu0
        %v457 = vadd.f32 0.0, %v456
        %v458 = vpop.f32.mrf.mxu0
        %v459 = vadd.f32 0.0, %v458
        %460 = vdwg.mxu0
        %461 = vmatpush.bf16.msra.mxu0 %v430
        %462 = vmatpush.bf16.msra.mxu0 %v428
        %463 = vmatpush.bf16.msra.mxu0 %v426
        %464 = vmatpush.bf16.msra.mxu0 %v424
        %465 = vmatpush.bf16.msra.mxu0 %v422
        %466 = vmatpush.bf16.msra.mxu0 %v420
        %467 = vmatpush.bf16.msra.mxu0 %v418
        %468 = vmatpush.bf16.msra.mxu0 %v416
        %469 = vmatmul.bf16.gmra.mxu0 %v350
        %v470 = vpop.f32.mrf.mxu0
        %v471 = vadd.f32 0.0, %v470
        %v472 = vpop.f32.mrf.mxu0
        %v473 = vadd.f32 0.0, %v472
        %474 = vdwg.mxu0
        %v475 = vadd.f32 %v344, %v457
        %v476 = vadd.f32 %v345, %v471
        %v477 = vadd.f32 %v346, %v459
        %v478 = vadd.f32 %v347, %v473
        %479 = vst [vmem:[#allocation2] sm:$0xff] %v475
        %480 = vst [vmem:[#allocation2 + $0x8] sm:$0xff] %v476
        %481 = vst [vmem:[#allocation2 + $0x10] sm:$0xff] %v477
        %482 = vst [vmem:[#allocation2 + $0x18] sm:$0xff] %v478
        %p483 = scmp.eq.s32.totalorder %s31, 1
        // Predicated region
        $region61: #{tpu_custom_call.1} parent=39 // pred_check
          %p484 = pneg %p483
        $region62: #{tpu_custom_call.1} parent=39 // pred_check_branch
          %486 = sbr.rel (%p484) target = $region64
        $region63: #{tpu_custom_call.1} parent=39 // pred_region
          %v487 = vld [vmem:[#allocation2] sm:$0xff]
          %v488 = vld [vmem:[#allocation2 + $0x8] sm:$0xff]
          %v489 = vld [vmem:[#allocation2 + $0x10] sm:$0xff]
          %v490 = vld [vmem:[#allocation2 + $0x18] sm:$0xff]
          %v491 = vld [vmem:[#allocation8] sm:$0x3]
          %v493 = vperm.slane %v491, 0
          %v494 = vperm.slane %v491, 1
          %v497 = vadd.f32 %v487, %v493
          %v498 = vadd.f32 %v488, %v494
          %v499 = vadd.f32 %v489, %v493
          %v500 = vadd.f32 %v490, %v494
          %v501 = vmul.f32 %v497, 0.5
          %v502 = vmul.f32 %v498, 0.5
          %v503 = vmul.f32 %v499, 0.5
          %v504 = vmul.f32 %v500, 0.5
          %v505 = vmul.f32 %v497, 0.70710677
          %v506 = vmul.f32 %v498, 0.70710677
          %v507 = vmul.f32 %v499, 0.70710677
          %v508 = vmul.f32 %v500, 0.70710677
          %v509 = vmul.f32 %v505, %v505
          %v510 = vmin.f32 16.0, %v509
          %v511 = vmul.f32 %v510, 2.1237322e-06
          %v512 = vadd.f32 %v511, 0.00028619796
          %v513 = vmul.f32 %v510, %v512
          %v514 = vadd.f32 %v513, 0.0036580483
          %v515 = vmul.f32 %v510, %v514
          %v516 = vadd.f32 %v515, 0.05243302
          %v517 = vmul.f32 %v510, %v516
          %v518 = vadd.f32 %v517, 0.18741608
          %v519 = vmul.f32 %v510, %v518
          %v520 = vadd.f32 %v519, 1.1283791
          %v521 = vmul.f32 %v505, %v520
          %v522 = vmul.f32 %v510, 3.8918573e-05
          %v523 = vadd.f32 %v522, 0.001143296
          %v524 = vmul.f32 %v510, %v523
          %v525 = vadd.f32 %v524, 0.014752088
          %v526 = vmul.f32 %v510, %v525
          %v527 = vadd.f32 %v526, 0.112945676
          %v528 = vmul.f32 %v510, %v527
          %v529 = vadd.f32 %v528, 0.4994258
          %v530 = vmul.f32 %v510, %v529
          %v531 = vadd.f32 %v530, 1.0
          %v532 = vrcp.pop %v531
          %v533 = vmul.f32 %v531, %v532
          %v534 = vsub.f32 1.0, %v533
          %v535 = vmul.f32 %v532, %v534
          %v536 = vadd.f32 %v532, %v535
          %vm537 = vweird.f32 %v531
          %vm538 = vweird.f32 %v532
          %vm539 = vmor %vm537, %vm538
          %v540 = vsel %vm539, %v532, %v536
          %v541 = vand.u32 2147483647, %v531
          %vm542 = vcmp.eq.f32.partialorder %v541, 8.507059e+37
          %v543 = vand.u32 %v531, 2147483648
          %v544 = vor.u32 1.1754944e-38, %v543
          %v545 = vsel %vm542, %v544, %v540
          %v546 = vmul.f32 %v521, %v545
          %v547 = vmin.f32 %v546, 1.0
          %v548 = vmax.f32 %v547, -1.0
          %v549 = vmul.f32 %v506, %v506
          %v550 = vmin.f32 16.0, %v549
          %v551 = vmul.f32 %v550, 2.1237322e-06
          %v552 = vadd.f32 %v551, 0.00028619796
          %v553 = vmul.f32 %v550, %v552
          %v554 = vadd.f32 %v553, 0.0036580483
          %v555 = vmul.f32 %v550, %v554
          %v556 = vadd.f32 %v555, 0.05243302
          %v557 = vmul.f32 %v550, %v556
          %v558 = vadd.f32 %v557, 0.18741608
          %v559 = vmul.f32 %v550, %v558
          %v560 = vadd.f32 %v559, 1.1283791
          %v561 = vmul.f32 %v506, %v560
          %v562 = vmul.f32 %v550, 3.8918573e-05
          %v563 = vadd.f32 %v562, 0.001143296
          %v564 = vmul.f32 %v550, %v563
          %v565 = vadd.f32 %v564, 0.014752088
          %v566 = vmul.f32 %v550, %v565
          %v567 = vadd.f32 %v566, 0.112945676
          %v568 = vmul.f32 %v550, %v567
          %v569 = vadd.f32 %v568, 0.4994258
          %v570 = vmul.f32 %v550, %v569
          %v571 = vadd.f32 %v570, 1.0
          %v572 = vrcp.pop %v571
          %v573 = vmul.f32 %v571, %v572
          %v574 = vsub.f32 1.0, %v573
          %v575 = vmul.f32 %v572, %v574
          %v576 = vadd.f32 %v572, %v575
          %vm577 = vweird.f32 %v571
          %vm578 = vweird.f32 %v572
          %vm579 = vmor %vm577, %vm578
          %v580 = vsel %vm579, %v572, %v576
          %v581 = vand.u32 2147483647, %v571
          %vm582 = vcmp.eq.f32.partialorder %v581, 8.507059e+37
          %v583 = vand.u32 %v571, 2147483648
          %v584 = vor.u32 1.1754944e-38, %v583
          %v585 = vsel %vm582, %v584, %v580
          %v586 = vmul.f32 %v561, %v585
          %v587 = vmin.f32 %v586, 1.0
          %v588 = vmax.f32 %v587, -1.0
          %v589 = vmul.f32 %v507, %v507
          %v590 = vmin.f32 16.0, %v589
          %v591 = vmul.f32 %v590, 2.1237322e-06
          %v592 = vadd.f32 %v591, 0.00028619796
          %v593 = vmul.f32 %v590, %v592
          %v594 = vadd.f32 %v593, 0.0036580483
          %v595 = vmul.f32 %v590, %v594
          %v596 = vadd.f32 %v595, 0.05243302
          %v597 = vmul.f32 %v590, %v596
          %v598 = vadd.f32 %v597, 0.18741608
          %v599 = vmul.f32 %v590, %v598
          %v600 = vadd.f32 %v599, 1.1283791
          %v601 = vmul.f32 %v507, %v600
          %v602 = vmul.f32 %v590, 3.8918573e-05
          %v603 = vadd.f32 %v602, 0.001143296
          %v604 = vmul.f32 %v590, %v603
          %v605 = vadd.f32 %v604, 0.014752088
          %v606 = vmul.f32 %v590, %v605
          %v607 = vadd.f32 %v606, 0.112945676
          %v608 = vmul.f32 %v590, %v607
          %v609 = vadd.f32 %v608, 0.4994258
          %v610 = vmul.f32 %v590, %v609
          %v611 = vadd.f32 %v610, 1.0
          %v612 = vrcp.pop %v611
          %v613 = vmul.f32 %v611, %v612
          %v614 = vsub.f32 1.0, %v613
          %v615 = vmul.f32 %v612, %v614
          %v616 = vadd.f32 %v612, %v615
          %vm617 = vweird.f32 %v611
          %vm618 = vweird.f32 %v612
          %vm619 = vmor %vm617, %vm618
          %v620 = vsel %vm619, %v612, %v616
          %v621 = vand.u32 2147483647, %v611
          %vm622 = vcmp.eq.f32.partialorder %v621, 8.507059e+37
          %v623 = vand.u32 %v611, 2147483648
          %v624 = vor.u32 1.1754944e-38, %v623
          %v625 = vsel %vm622, %v624, %v620
          %v626 = vmul.f32 %v601, %v625
          %v627 = vmin.f32 %v626, 1.0
          %v628 = vmax.f32 %v627, -1.0
          %v629 = vmul.f32 %v508, %v508
          %v630 = vmin.f32 16.0, %v629
          %v631 = vmul.f32 %v630, 2.1237322e-06
          %v632 = vadd.f32 %v631, 0.00028619796
          %v633 = vmul.f32 %v630, %v632
          %v634 = vadd.f32 %v633, 0.0036580483
          %v635 = vmul.f32 %v630, %v634
          %v636 = vadd.f32 %v635, 0.05243302
          %v637 = vmul.f32 %v630, %v636
          %v638 = vadd.f32 %v637, 0.18741608
          %v639 = vmul.f32 %v630, %v638
          %v640 = vadd.f32 %v639, 1.1283791
          %v641 = vmul.f32 %v508, %v640
          %v642 = vmul.f32 %v630, 3.8918573e-05
          %v643 = vadd.f32 %v642, 0.001143296
          %v644 = vmul.f32 %v630, %v643
          %v645 = vadd.f32 %v644, 0.014752088
          %v646 = vmul.f32 %v630, %v645
          %v647 = vadd.f32 %v646, 0.112945676
          %v648 = vmul.f32 %v630, %v647
          %v649 = vadd.f32 %v648, 0.4994258
          %v650 = vmul.f32 %v630, %v649
          %v651 = vadd.f32 %v650, 1.0
          %v652 = vrcp.pop %v651
          %v653 = vmul.f32 %v651, %v652
          %v654 = vsub.f32 1.0, %v653
          %v655 = vmul.f32 %v652, %v654
          %v656 = vadd.f32 %v652, %v655
          %vm657 = vweird.f32 %v651
          %vm658 = vweird.f32 %v652
          %vm659 = vmor %vm657, %vm658
          %v660 = vsel %vm659, %v652, %v656
          %v661 = vand.u32 2147483647, %v651
          %vm662 = vcmp.eq.f32.partialorder %v661, 8.507059e+37
          %v663 = vand.u32 %v651, 2147483648
          %v664 = vor.u32 1.1754944e-38, %v663
          %v665 = vsel %vm662, %v664, %v660
          %v666 = vmul.f32 %v641, %v665
          %v667 = vmin.f32 %v666, 1.0
          %v668 = vmax.f32 %v667, -1.0
          %v669 = vadd.f32 %v548, 1.0
          %v670 = vadd.f32 %v588, 1.0
          %v671 = vadd.f32 %v628, 1.0
          %v672 = vadd.f32 %v668, 1.0
          %v673 = vmul.f32 %v501, %v669
          %v674 = vmul.f32 %v502, %v670
          %v675 = vmul.f32 %v503, %v671
          %v676 = vmul.f32 %v504, %v672
          %v677 = vadd.f32 %v673, %v674
          %678 = vadd.xlane.f32.xlu0 %v677
          %v679 = vpop.xlane.xlu0 %678
          %v680 = vadd.f32 %v675, %v676
          %681 = vadd.xlane.f32.xlu0 %v680
          %v682 = vpop.xlane.xlu0 %681
          %v683 = vrcp.pop 256.0
          %v684 = vmul.f32 256.0, %v683
          %v685 = vsub.f32 1.0, %v684
          %v686 = vmul.f32 %v683, %v685
          %v687 = vadd.f32 %v683, %v686
          %vm688 = vweird.f32 %v683
          %v689 = vsel %vm688, %v683, %v687
          %v690 = vmul.f32 %v679, %v689
          %v691 = vmul.f32 %v682, %v689
          %v692 = vsub.f32 %v673, %v690
          %v693 = vsub.f32 %v674, %v690
          %v694 = vsub.f32 %v675, %v691
          %v695 = vsub.f32 %v676, %v691
          %v696 = vmul.f32 %v692, %v692
          %v697 = vmul.f32 %v693, %v693
          %v698 = vmul.f32 %v694, %v694
          %v699 = vmul.f32 %v695, %v695
          %v700 = vadd.f32 %v696, %v697
          %701 = vadd.xlane.f32.xlu0 %v700
          %v702 = vpop.xlane.xlu0 %701
          %v703 = vadd.f32 %v698, %v699
          %704 = vadd.xlane.f32.xlu0 %v703
          %v705 = vpop.xlane.xlu0 %704
          %v706 = vmul.f32 %v702, %v689
          %v707 = vmul.f32 %v705, %v689
          %v708 = vadd.f32 %v706, 1e-05
          %v709 = vadd.f32 %v707, 1e-05
          %v710 = vrsqrt.pop %v708
          %v711 = vmul.f32 %v710, %v708
          %v712 = vmul.f32 %v711, %v710
          %v713 = vmul.f32 0.5, %v712
          %v714 = vsub.f32 1.5, %v713
          %v715 = vmul.f32 %v710, %v714
          %vm716 = vweird.f32 %v708
          %vm717 = vweird.f32 %v710
          %vm718 = vmor %vm716, %vm717
          %v719 = vsel %vm718, %v710, %v715
          %v720 = vrsqrt.pop %v709
          %v721 = vmul.f32 %v720, %v709
          %v722 = vmul.f32 %v721, %v720
          %v723 = vmul.f32 0.5, %v722
          %v724 = vsub.f32 1.5, %v723
          %v725 = vmul.f32 %v720, %v724
          %vm726 = vweird.f32 %v709
          %vm727 = vweird.f32 %v720
          %vm728 = vmor %vm726, %vm727
          %v729 = vsel %vm728, %v720, %v725
          %v730 = vmul.f32 %v692, %v719
          %v731 = vmul.f32 %v693, %v719
          %v732 = vmul.f32 %v694, %v729
          %v733 = vmul.f32 %v695, %v729
          %v734 = vld [vmem:[%s3] sm:$0x3]
          %v736 = vperm.slane %v734, 0
          %v737 = vperm.slane %v734, 1
          %v740 = vmul.f32 %v730, %v736
          %v741 = vmul.f32 %v731, %v737
          %v742 = vmul.f32 %v732, %v736
          %v743 = vmul.f32 %v733, %v737
          %v744 = vld [vmem:[#allocation9] sm:$0x3]
          %v746 = vperm.slane %v744, 0
          %v747 = vperm.slane %v744, 1
          %v750 = vadd.f32 %v740, %v746
          %v751 = vadd.f32 %v741, %v747
          %v752 = vadd.f32 %v742, %v746
          %v753 = vadd.f32 %v743, %v747
          %v754 = vpack.c.bf16 %v751, %v750
          %v755 = vpack.c.bf16 %v753, %v752
          %756 = vst [vmem:[%s332] sm:$0xff] %v754
          %757 = vst [vmem:[%s332 + $0x8] sm:$0xff] %v755
        $region64: #{tpu_custom_call.1} parent=39 // pred_fallthru
          _
        %s758 = sand.u32 %s163, 1
        %s759 = scalar_lea.sflag [#allocation5], %s758
        %s760 = sand.u32 %s163, 1
        %s761 = smul.addr %s760, 16
        %s762 = scalar_lea.vmem [#allocation11], %s761
        // Predicated region
        $region65: #{tpu_custom_call.1} parent=39 // pred_check
          %p763 = pneg %p173
        $region66: #{tpu_custom_call.1} parent=39 // pred_check_branch
          %765 = sbr.rel (%p763) target = $region68
        $region67: #{tpu_custom_call.1} parent=39 // pred_region
          %s766 = smul.u32 2, %s30
          %768 = vsyncadd %s759, 0
          %s769 = smul.addr %s766, 2
          %s770 = smul.addr %s769, 4
          %s771 = scalar_lea.hbm %s5, %s770
          %s772 = sshll.u32 %s762, 4
          %s773 = int_to_ptr.vmem [resolvable:$true] %s772
          %s774 = sshll.u32 %s771, 4
          %s775 = int_to_ptr.hbm [resolvable:$true] %s774
          %780 = dma.vmem_to_hbm [thread:$0]  %s773, 256, %s775, %s759, 128, 128, 8
        $region68: #{tpu_custom_call.1} parent=39 // pred_fallthru
          _
      $region40: #{tpu_custom_call.1} parent=5 // pred_fallthru
        _
      %p781 = scmp.le.s32.totalorder 2, %s21
      // Predicated region
      $region69: #{tpu_custom_call.1} parent=5 // pred_check
        %p782 = pneg %p781
      $region70: #{tpu_custom_call.1} parent=5 // pred_check_branch
        %784 = sbr.rel (%p782) target = $region72
      $region71: #{tpu_custom_call.1} parent=5 // pred_region
        %s785 = ssub.s32 %s21, 2
        // Predicated region
        $region73: #{tpu_custom_call.1} parent=71 // pred_check
          %p786 = pneg %p179
        $region74: #{tpu_custom_call.1} parent=71 // pred_check_branch
          %788 = sbr.rel (%p786) target = $region76
        $region75: #{tpu_custom_call.1} parent=71 // pred_region
          %s789 = sand.u32 %s164, 1
          %s790 = scalar_lea.sflag [#allocation5], %s789
          %s791 = sand.u32 %s164, 1
          %s792 = smul.addr %s791, 16
          %s793 = scalar_lea.vmem [#allocation11], %s792
          %795 = dma.done %s790, 256
        $region76: #{tpu_custom_call.1} parent=71 // pred_fallthru
          _
      $region72: #{tpu_custom_call.1} parent=5 // pred_fallthru
        _
    $region6: #{tpu_custom_call.1} parent=1 // loop_footer
      %s25 = sadd.s32 1, %s21
    $region7: #{tpu_custom_call.1} parent=1 // loop_footer_branch
      %20 = sbr.rel target = $region3
    $region8: #{tpu_custom_call.1} parent=1 // loop_exit
      _
    %796 = vsyncpa [#allocation4], 1
    %s797 = scalar_lea.sflag [#allocation4], 1
    %798 = vsyncpa %s797, 1
    %799 = vsyncpa [#allocation7], 1
    %s800 = scalar_lea.sflag [#allocation7], 1
    %801 = vsyncpa %s800, 1
    %802 = vsyncpa [#allocation10], 1
    %803 = vsyncpa [#allocation5], 1
    %s804 = scalar_lea.sflag [#allocation5], 1
    %805 = vsyncpa %s804, 1

</llo_original>
